<compile_context>
chip_gen: v7x
topology: tpu7x:2x2x1
jax: 0.10.0
libtpu: 0.0.40
codegen_flags: <defaults>
</compile_context>

<pallas_src>
import numpy as np
import jax
import jax.numpy as jnp
from jax.experimental import pallas as pl
from jax.experimental.pallas import tpu as pltpu


# ----------------------------------------------------------------------------
# Parameter construction (mirrors the PyTorch module's __init__ helpers)
# ----------------------------------------------------------------------------
def make_weights(N, weights):
    assert len(weights) % 2 == 1, f"Expected odd number of weights, got: {weights}"
    center = int((len(weights) - 1) / 2)
    tokens = np.zeros((N, N))
    for i in range(N):
        token = np.zeros(N)
        for j, w in enumerate(weights):
            ind = i + j - center
            ind = np.clip(ind, 0, N - 1)
            token[ind] += w
        tokens[i] = token
    assert np.allclose(tokens.sum(axis=-1), 1)
    return tokens


def add_stop_token(tokens):
    N = len(tokens)
    pad = np.zeros((N, 1))
    tokens = np.concatenate([tokens, pad], axis=1)
    stop_weight = np.zeros((1, N + 1))
    stop_weight[0, -1] = 1
    tokens = np.concatenate([tokens, stop_weight], axis=0)
    assert tokens.shape[0] == tokens.shape[1]
    assert np.allclose(tokens.sum(axis=-1), 1)
    return tokens


# ----------------------------------------------------------------------------
# Helpers
# ----------------------------------------------------------------------------
def _round_up(v, m):
    return ((v + m - 1) // m) * m


def _auto_fold(embedding_dim):
    # Pick the token fold so fold * D is a lane-dense multiple of 128
    # (256 preferred: matches the 256-wide MXU on v6e/v7x).
    if 256 % embedding_dim == 0:
        return 256 // embedding_dim
    if 128 % embedding_dim == 0:
        return 128 // embedding_dim
    # TODO(synk): for D not dividing 128 the stores are masked (still correct).
    return 1


def build_smooth_tables(weights_table, embed_table, *, fold, table_dtype=jnp.float32):
    """One-time precompute (hoist out of the per-call forward).

    Returns:
      s_block : [fold*N, fold*D] block-diagonal smoothed table kron(I_fold, W @ E)
      col_ids : [1, fold*N] int32 column-id plane for the in-kernel one-hot compare
    """
    N = weights_table.shape[0]
    S = jnp.dot(
        weights_table.astype(jnp.float32),
        embed_table.astype(jnp.float32),
        preferred_element_type=jnp.float32,
    )  # [N, D]
    s_block = jnp.kron(jnp.eye(fold, dtype=jnp.float32), S).astype(table_dtype)
    col_ids = jnp.arange(fold * N, dtype=jnp.int32).reshape(1, fold * N)
    return s_block, col_ids


# ----------------------------------------------------------------------------
# Pallas kernel
# ----------------------------------------------------------------------------
def smooth_embedding_kernel(idx_ref, col_ref, table_ref, o_ref):
    # idx_ref   : VMEM, [TR, fold] int32  — token ids with the k*N block offsets pre-added
    # col_ref   : VMEM, [1, fold*N] int32 — resident column-id plane (constant index_map)
    # table_ref : VMEM, [fold*N, fold*D]  — resident block-diagonal smoothed table
    # o_ref     : VMEM, [TR, fold*D]      — lane-dense output slab
    idx = idx_ref[...]                       # (TR, fold)
    col = col_ref[...]                       # (1, fold*N)
    fold = idx.shape[1]

    # Disjoint block-diagonal ranges -> boolean ORs build the full one-hot; one select.
    mask = col == idx[:, 0:1]
    for k in range(1, fold):
        mask = mask | (col == idx[:, k : k + 1])
    one_hot = jnp.where(mask, 1.0, 0.0).astype(table_ref.dtype)

    # Single MXU pass: (TR, fold*N) @ (fold*N, fold*D) -> (TR, fold*D).
    o_ref[...] = jnp.dot(
        one_hot, table_ref[...], preferred_element_type=jnp.float32
    ).astype(o_ref.dtype)


# ----------------------------------------------------------------------------
# Wrapper
# ----------------------------------------------------------------------------
def smooth_embedding_forward(
    x, s_block, col_ids, *, fold, block_rows=1024, out_dtype=jnp.float32
):
    """x: [B, T] int -> [B, T, D]  (== einsum('btn,nd->btd', W[x], E))."""
    B, T = x.shape
    N = s_block.shape[0] // fold
    D = s_block.shape[1] // fold

    # Flatten + clamp (PyTorch would raise on OOB; clamping is the safe kernel choice).
    M = B * T
    x_flat = jnp.clip(x.reshape(M).astype(jnp.int32), 0, N - 1)

    # Tile sizing: big tiles, but keep >= 2 grid steps when possible (megacore/v7x).
    rows_needed = -(-M // fold)
    br = max(8, _round_up(int(block_rows), 8))
    half = max(8, _round_up(-(-rows_needed // 2), 8))
    tr = min(br, half)
    rows_pad = _round_up(rows_needed, tr)
    m_pad = rows_pad * fold

    x_flat = jnp.pad(x_flat, (0, m_pad - M))          # pad with a valid index (0)
    # Pre-add the block-diagonal column offsets (hoists the +k*N adds out of the kernel).
    idx2d = x_flat.reshape(rows_pad, fold) + (jnp.arange(fold, dtype=jnp.int32) * N)[None, :]

    grid = (rows_pad // tr,)

    grid_spec = pltpu.PrefetchScalarGridSpec(
        num_scalar_prefetch=0,
        grid=grid,
        in_specs=[
            pl.BlockSpec((tr, fold), lambda i: (i, 0)),             # per-tile token ids
            pl.BlockSpec((1, fold * N), lambda i: (0, 0)),          # resident column ids
            pl.BlockSpec((fold * N, fold * D), lambda i: (0, 0)),   # resident table
        ],
        out_specs=pl.BlockSpec((tr, fold * D), lambda i: (i, 0)),
    )

    out2d = pl.pallas_call(
        smooth_embedding_kernel,
        out_shape=jax.ShapeDtypeStruct((rows_pad, fold * D), out_dtype),
        grid_spec=grid_spec,
        compiler_params=pltpu.CompilerParams(dimension_semantics=("parallel",)),
    )(idx2d, col_ids, s_block)

    # Un-fold the lane packing and drop the padding.  NOTE: for a store-bound op this
    # reshape is a relayout; downstream consumers that can take the folded
    # (rows, fold*D) slab directly should do so (keep it under jit so XLA may fuse it).
    out_flat = out2d.reshape(m_pad, D)[:M]
    return out_flat.reshape(B, T, D)


# ----------------------------------------------------------------------------
# Demo / correctness check
# ----------------------------------------------------------------------------
if __name__ == "__main__":
    # Module config (small): num_embeddings=16, smoothing weights [.25,.5,.25],
    # stop_token=True -> N = 17, embedding_dim D = 32.
    num_embeddings = 16
    embedding_dim = 32
    smoothing = [0.25, 0.5, 0.25]

    w_np = make_weights(num_embeddings, smoothing)
    w_np = add_stop_token(w_np)
    N = w_np.shape[0]  # 17

    key = jax.random.PRNGKey(0)
    k_embed, k_x, k_x2 = jax.random.split(key, 3)

    # nn.Embedding default init: weight ~ N(0, 1)
    embed_table = jax.random.normal(k_embed, (N, embedding_dim), dtype=jnp.float32)
    weights_table = jnp.asarray(w_np, dtype=jnp.float32)

    fold = _auto_fold(embedding_dim)  # 8 for D=32
    # One-time precompute of the smoothed block-diagonal table (hoisted out of forward).
    s_block, col_ids = build_smooth_tables(
        weights_table, embed_table, fold=fold, table_dtype=jnp.float32
    )

    fwd = jax.jit(
        lambda xs: smooth_embedding_forward(
            xs, s_block, col_ids, fold=fold, block_rows=1024, out_dtype=jnp.float32
        )
    )

    def reference(xs):
        w_x = weights_table[xs]                               # [B, T, N]
        return jnp.einsum("btn,nd->btd", w_x, embed_table)    # [B, T, D]

    # --- small shape (matches the module's typical tiny context) -------------
    B, T = 2, 8
    x = jax.random.randint(k_x, (B, T), 0, N, dtype=jnp.int32)
    out = jax.block_until_ready(fwd(x))
    ref = reference(x)
    assert out.shape == (B, T, embedding_dim)
    assert jnp.allclose(weights_table[x].sum(-1), 1.0, atol=1e-5)   # module's assert
    np.testing.assert_allclose(np.asarray(out), np.asarray(ref), rtol=1e-5, atol=1e-5)

    # --- larger shape: exercises padding + a multi-step (>= 2) parallel grid --
    B2, T2 = 4, 300
    x2 = jax.random.randint(k_x2, (B2, T2), 0, N, dtype=jnp.int32)
    out2 = jax.block_until_ready(fwd(x2))
    np.testing.assert_allclose(
        np.asarray(out2), np.asarray(reference(x2)), rtol=1e-5, atol=1e-5
    )

    print("KERNEL_OK")
</pallas_src>

<mosaic_0001>
module attributes {stable_mosaic.version = 11 : i64} {
  func.func @smooth_embedding_kernel(%arg0: i32, %arg1: memref<8x8xi32, #tpu.memory_space<vmem>>, %arg2: memref<1x136xi32, #tpu.memory_space<vmem>>, %arg3: memref<136x256xf32, #tpu.memory_space<vmem>>, %arg4: memref<8x256xf32, #tpu.memory_space<vmem>>) attributes {dimension_semantics = [#tpu.dimension_semantics<parallel>], iteration_bounds = array<i64: 1>, scalar_prefetch = 0 : i64, scratch_operands = 0 : i64, tpu.core_type = #tpu.core_type<tc>, window_params = [{transform_indices = @transform_0, window_bounds = array<i64: 8, 8>}, {pipeline_mode = #tpu.pipeline_mode<synchronous>, transform_indices = @transform_1, window_bounds = array<i64: 1, 136>}, {pipeline_mode = #tpu.pipeline_mode<synchronous>, transform_indices = @transform_2, window_bounds = array<i64: 136, 256>}, {transform_indices = @transform_3, window_bounds = array<i64: 8, 256>}]} {
    %c0 = arith.constant 0 : index
    %c0_0 = arith.constant 0 : index
    %0 = vector.load %arg1[%c0, %c0_0] : memref<8x8xi32, #tpu.memory_space<vmem>>, vector<8x8xi32>
    %c0_1 = arith.constant 0 : index
    %c0_2 = arith.constant 0 : index
    %1 = vector.load %arg2[%c0_1, %c0_2] : memref<1x136xi32, #tpu.memory_space<vmem>>, vector<1x136xi32>
    %2 = vector.extract_strided_slice %0 {offsets = [0, 0], sizes = [8, 1], strides = [1, 1]} : vector<8x8xi32> to vector<8x1xi32>
    %3 = vector.broadcast %1 : vector<1x136xi32> to vector<8x136xi32>
    %4 = vector.broadcast %2 : vector<8x1xi32> to vector<8x136xi32>
    %5 = arith.cmpi eq, %3, %4 : vector<8x136xi32>
    %6 = vector.extract_strided_slice %0 {offsets = [0, 1], sizes = [8, 1], strides = [1, 1]} : vector<8x8xi32> to vector<8x1xi32>
    %7 = vector.broadcast %1 : vector<1x136xi32> to vector<8x136xi32>
    %8 = vector.broadcast %6 : vector<8x1xi32> to vector<8x136xi32>
    %9 = arith.cmpi eq, %7, %8 : vector<8x136xi32>
    %10 = arith.ori %5, %9 : vector<8x136xi1>
    %11 = vector.extract_strided_slice %0 {offsets = [0, 2], sizes = [8, 1], strides = [1, 1]} : vector<8x8xi32> to vector<8x1xi32>
    %12 = vector.broadcast %1 : vector<1x136xi32> to vector<8x136xi32>
    %13 = vector.broadcast %11 : vector<8x1xi32> to vector<8x136xi32>
    %14 = arith.cmpi eq, %12, %13 : vector<8x136xi32>
    %15 = arith.ori %10, %14 : vector<8x136xi1>
    %16 = vector.extract_strided_slice %0 {offsets = [0, 3], sizes = [8, 1], strides = [1, 1]} : vector<8x8xi32> to vector<8x1xi32>
    %17 = vector.broadcast %1 : vector<1x136xi32> to vector<8x136xi32>
    %18 = vector.broadcast %16 : vector<8x1xi32> to vector<8x136xi32>
    %19 = arith.cmpi eq, %17, %18 : vector<8x136xi32>
    %20 = arith.ori %15, %19 : vector<8x136xi1>
    %21 = vector.extract_strided_slice %0 {offsets = [0, 4], sizes = [8, 1], strides = [1, 1]} : vector<8x8xi32> to vector<8x1xi32>
    %22 = vector.broadcast %1 : vector<1x136xi32> to vector<8x136xi32>
    %23 = vector.broadcast %21 : vector<8x1xi32> to vector<8x136xi32>
    %24 = arith.cmpi eq, %22, %23 : vector<8x136xi32>
    %25 = arith.ori %20, %24 : vector<8x136xi1>
    %26 = vector.extract_strided_slice %0 {offsets = [0, 5], sizes = [8, 1], strides = [1, 1]} : vector<8x8xi32> to vector<8x1xi32>
    %27 = vector.broadcast %1 : vector<1x136xi32> to vector<8x136xi32>
    %28 = vector.broadcast %26 : vector<8x1xi32> to vector<8x136xi32>
    %29 = arith.cmpi eq, %27, %28 : vector<8x136xi32>
    %30 = arith.ori %25, %29 : vector<8x136xi1>
    %31 = vector.extract_strided_slice %0 {offsets = [0, 6], sizes = [8, 1], strides = [1, 1]} : vector<8x8xi32> to vector<8x1xi32>
    %32 = vector.broadcast %1 : vector<1x136xi32> to vector<8x136xi32>
    %33 = vector.broadcast %31 : vector<8x1xi32> to vector<8x136xi32>
    %34 = arith.cmpi eq, %32, %33 : vector<8x136xi32>
    %35 = arith.ori %30, %34 : vector<8x136xi1>
    %36 = vector.extract_strided_slice %0 {offsets = [0, 7], sizes = [8, 1], strides = [1, 1]} : vector<8x8xi32> to vector<8x1xi32>
    %37 = vector.broadcast %1 : vector<1x136xi32> to vector<8x136xi32>
    %38 = vector.broadcast %36 : vector<8x1xi32> to vector<8x136xi32>
    %39 = arith.cmpi eq, %37, %38 : vector<8x136xi32>
    %40 = arith.ori %35, %39 : vector<8x136xi1>
    %cst = arith.constant 1.000000e+00 : f32
    %cst_3 = arith.constant 0.000000e+00 : f32
    %41 = vector.broadcast %cst : f32 to vector<8x136xf32>
    %42 = vector.broadcast %cst_3 : f32 to vector<8x136xf32>
    %43 = arith.select %40, %41, %42 : vector<8x136xi1>, vector<8x136xf32>
    %c0_4 = arith.constant 0 : index
    %c0_5 = arith.constant 0 : index
    %44 = vector.load %arg3[%c0_4, %c0_5] : memref<136x256xf32, #tpu.memory_space<vmem>>, vector<136x256xf32>
    %cst_6 = arith.constant dense<0.000000e+00> : vector<8x256xf32>
    %45 = tpu.matmul %43, %44, %cst_6 {dimension_numbers = #tpu.dot_dimension_numbers<[1], [0], [0], [1], [0, 0, 1, 1], [], []>} : vector<8x136xf32>, vector<136x256xf32>, vector<8x256xf32> -> vector<8x256xf32>
    %c0_7 = arith.constant 0 : index
    %c0_8 = arith.constant 0 : index
    %46 = vector.load %arg4[%c0_7, %c0_8] : memref<8x256xf32, #tpu.memory_space<vmem>>, vector<8x256xf32>
    tpu.vector_store %arg4[%c0_7, %c0_8], %45 {strides = array<i32>} : memref<8x256xf32, #tpu.memory_space<vmem>>, vector<8x256xf32>,
    return
  }
  func.func @transform_0(%arg0: i32) -> (i32, i32) {
    %c0_i32 = arith.constant 0 : i32
    %c0_i32_0 = arith.constant 0 : i32
    return %arg0, %c0_i32 : i32, i32
  }
  func.func @transform_1(%arg0: i32) -> (i32, i32) {
    %c0_i32 = arith.constant 0 : i32
    %c0_i32_0 = arith.constant 0 : i32
    %c0_i32_1 = arith.constant 0 : i32
    return %c0_i32, %c0_i32_0 : i32, i32
  }
  func.func @transform_2(%arg0: i32) -> (i32, i32) {
    %c0_i32 = arith.constant 0 : i32
    %c0_i32_0 = arith.constant 0 : i32
    %c0_i32_1 = arith.constant 0 : i32
    return %c0_i32, %c0_i32_0 : i32, i32
  }
  func.func @transform_3(%arg0: i32) -> (i32, i32) {
    %c0_i32 = arith.constant 0 : i32
    %c0_i32_0 = arith.constant 0 : i32
    return %arg0, %c0_i32 : i32, i32
  }
}

</mosaic_0001>

<llo_original>
// kernel: _lambda_.1
$region0: #{_lambda_.1}
  #allocation0 [shape = 'u32[]', space=smem, size = 0x4, offset = 0x4, fixed_abs, tag = 'smem constant byte address 0x4 - core index']
  #allocation1 [shape = 'u32[144,128]{1,0:T(1,128)}', space=vmem, size = 0x12000, scoped, tag = 'internal scratch']
  %s0 = inlined_call_operand.vmem [shape: s32[8,8], index: 0, kind: input, shape index: {}]
  %s1 = inlined_call_operand.vmem [shape: s32[1,136], index: 1, kind: input, shape index: {}]
  %s2 = inlined_call_operand.hbm [shape: f32[136,256], index: 2, kind: input, shape index: {}]
  %s3 = inlined_call_operand.vmem [shape: f32[8,256], index: 3, kind: output, shape index: {}]
  %s4 = sld [smem:[#allocation0]]
  $region26: #{_lambda_.1} parent=0
    _
  %s6 = ssub.s32 1, %s4
  %s7 = scalar_select 0, %s6, %s4
  $region1: #{_lambda_.1} parent=0
    #allocation2 [shape = 'u8[139264]{0}', space=vmem, size = 0x22000, scoped, tag = 'input window, operand 2, single buffered']
    #allocation3 [shape = 's32[1]{0}', space=sflag, size = 0x4, scoped, tag = 'scoped memory for _lambda_.1']
    %8 = vsyncpa [#allocation3], 0
    // Predicated region
    $region2: #{_lambda_.1} parent=1 // pred_check
      _
    $region3: #{_lambda_.1} parent=1 // pred_check_branch
      %10 = sbr.rel (0) target = $region5
    $region4: #{_lambda_.1} parent=1 // pred_region
      _
    $region5: #{_lambda_.1} parent=1 // pred_fallthru
      _
    // Predicated region
    $region6: #{_lambda_.1} parent=1 // pred_check
      _
    $region7: #{_lambda_.1} parent=1 // pred_check_branch
      %12 = sbr.rel (0) target = $region9
    $region8: #{_lambda_.1} parent=1 // pred_region
      _
    $region9: #{_lambda_.1} parent=1 // pred_fallthru
      _
    // Predicated region
    $region10: #{_lambda_.1} parent=1 // pred_check
      _
    $region11: #{_lambda_.1} parent=1 // pred_check_branch
      %14 = sbr.rel (0) target = $region13
    $region12: #{_lambda_.1} parent=1 // pred_region
      %s16 = ssub.s32 4352, 4352
      %17 = vsyncadd [#allocation3], %s16
      %s18 = sshll.u32 [#allocation2], 4
      %s19 = int_to_ptr.vmem [resolvable:$true] %s18
      %24 = dma.hbm_to_vmem [thread:$0]  %s2, 4352, %s19, [#allocation3], 256, 256, 16
    $region13: #{_lambda_.1} parent=1 // pred_fallthru
      _
    // Predicated region
    $region14: #{_lambda_.1} parent=1 // pred_check
      _
    $region15: #{_lambda_.1} parent=1 // pred_check_branch
      %26 = sbr.rel (0) target = $region17
    $region16: #{_lambda_.1} parent=1 // pred_region
      %27 = dma.done [#allocation3], 4352
    $region17: #{_lambda_.1} parent=1 // pred_fallthru
      _
    %v28 = vld [vmem:[%s0] sm:$0xff]
    %v29 = vld [vmem:[%s1] sm:$0x3]
    %v30 = vlaneseq
    %v31 = vshrl.u32 %v30, 7
    %v32 = vsub.s32 0, %v31
    %v33 = vrot.slane %v29, %v32
    %v34 = vlaneseq
    %v35 = vshrl.u32 %v34, 7
    %v36 = vsub.s32 1, %v35
    %v37 = vrot.slane %v29, %v36
    %38 = vset.pattern.permute.xlu0 0
    %39 = vperm.xlu0 %38, %v28
    %v40 = vpop.permute.xlu0 %39
    %vm41 = vcmp.eq.s32.totalorder %v33, %v40
    %vm42 = vcmp.eq.s32.totalorder %v37, %v40
    %43 = vset.pattern.permute.xlu0 1
    %44 = vperm.xlu0 %43, %v28
    %v45 = vpop.permute.xlu0 %44
    %vm46 = vcmp.eq.s32.totalorder %v33, %v45
    %vm47 = vcmp.eq.s32.totalorder %v37, %v45
    %vm48 = vmor %vm41, %vm46
    %vm49 = vmor %vm42, %vm47
    %50 = vset.pattern.permute.xlu0 2
    %51 = vperm.xlu0 %50, %v28
    %v52 = vpop.permute.xlu0 %51
    %vm53 = vcmp.eq.s32.totalorder %v33, %v52
    %vm54 = vcmp.eq.s32.totalorder %v37, %v52
    %vm55 = vmor %vm48, %vm53
    %vm56 = vmor %vm49, %vm54
    %57 = vset.pattern.permute.xlu0 3
    %58 = vperm.xlu0 %57, %v28
    %v59 = vpop.permute.xlu0 %58
    %vm60 = vcmp.eq.s32.totalorder %v33, %v59
    %vm61 = vcmp.eq.s32.totalorder %v37, %v59
    %vm62 = vmor %vm55, %vm60
    %vm63 = vmor %vm56, %vm61
    %64 = vset.pattern.permute.xlu0 4
    %65 = vperm.xlu0 %64, %v28
    %v66 = vpop.permute.xlu0 %65
    %vm67 = vcmp.eq.s32.totalorder %v33, %v66
    %vm68 = vcmp.eq.s32.totalorder %v37, %v66
    %vm69 = vmor %vm62, %vm67
    %vm70 = vmor %vm63, %vm68
    %71 = vset.pattern.permute.xlu0 5
    %72 = vperm.xlu0 %71, %v28
    %v73 = vpop.permute.xlu0 %72
    %vm74 = vcmp.eq.s32.totalorder %v33, %v73
    %vm75 = vcmp.eq.s32.totalorder %v37, %v73
    %vm76 = vmor %vm69, %vm74
    %vm77 = vmor %vm70, %vm75
    %78 = vset.pattern.permute.xlu0 6
    %79 = vperm.xlu0 %78, %v28
    %v80 = vpop.permute.xlu0 %79
    %vm81 = vcmp.eq.s32.totalorder %v33, %v80
    %vm82 = vcmp.eq.s32.totalorder %v37, %v80
    %vm83 = vmor %vm76, %vm81
    %vm84 = vmor %vm77, %vm82
    %85 = vset.pattern.permute.xlu0 7
    %86 = vperm.xlu0 %85, %v28
    %v87 = vpop.permute.xlu0 %86
    %vm88 = vcmp.eq.s32.totalorder %v33, %v87
    %vm89 = vcmp.eq.s32.totalorder %v37, %v87
    %vm90 = vmor %vm83, %vm88
    %vm91 = vmor %vm84, %vm89
    %v92 = vsel %vm90, 1.0, 0.0
    %v93 = vsel %vm91, 1.0, 0.0
    %v94 = vld [vmem:[#allocation2] sm:$0xff]
    %v95 = vld [vmem:[#allocation2 + $0x8] sm:$0xff]
    %v96 = vld [vmem:[#allocation2 + $0x10] sm:$0xff]
    %v97 = vld [vmem:[#allocation2 + $0x18] sm:$0xff]
    %v98 = vld [vmem:[#allocation2 + $0x20] sm:$0xff]
    %v99 = vld [vmem:[#allocation2 + $0x28] sm:$0xff]
    %v100 = vld [vmem:[#allocation2 + $0x30] sm:$0xff]
    %v101 = vld [vmem:[#allocation2 + $0x38] sm:$0xff]
    %v102 = vld [vmem:[#allocation2 + $0x40] sm:$0xff]
    %v103 = vld [vmem:[#allocation2 + $0x48] sm:$0xff]
    %v104 = vld [vmem:[#allocation2 + $0x50] sm:$0xff]
    %v105 = vld [vmem:[#allocation2 + $0x58] sm:$0xff]
    %v106 = vld [vmem:[#allocation2 + $0x60] sm:$0xff]
    %v107 = vld [vmem:[#allocation2 + $0x68] sm:$0xff]
    %v108 = vld [vmem:[#allocation2 + $0x70] sm:$0xff]
    %v109 = vld [vmem:[#allocation2 + $0x78] sm:$0xff]
    %v110 = vld [vmem:[#allocation2 + $0x80] sm:$0xff]
    %v111 = vld [vmem:[#allocation2 + $0x88] sm:$0xff]
    %v112 = vld [vmem:[#allocation2 + $0x90] sm:$0xff]
    %v113 = vld [vmem:[#allocation2 + $0x98] sm:$0xff]
    %v114 = vld [vmem:[#allocation2 + $0xa0] sm:$0xff]
    %v115 = vld [vmem:[#allocation2 + $0xa8] sm:$0xff]
    %v116 = vld [vmem:[#allocation2 + $0xb0] sm:$0xff]
    %v117 = vld [vmem:[#allocation2 + $0xb8] sm:$0xff]
    %v118 = vld [vmem:[#allocation2 + $0xc0] sm:$0xff]
    %v119 = vld [vmem:[#allocation2 + $0xc8] sm:$0xff]
    %v120 = vld [vmem:[#allocation2 + $0xd0] sm:$0xff]
    %v121 = vld [vmem:[#allocation2 + $0xd8] sm:$0xff]
    %v122 = vld [vmem:[#allocation2 + $0xe0] sm:$0xff]
    %v123 = vld [vmem:[#allocation2 + $0xe8] sm:$0xff]
    %v124 = vld [vmem:[#allocation2 + $0xf0] sm:$0xff]
    %v125 = vld [vmem:[#allocation2 + $0xf8] sm:$0xff]
    %v126 = vld [vmem:[#allocation2 + $0x100] sm:$0xff]
    %v127 = vld [vmem:[#allocation2 + $0x108] sm:$0xff]
    %vm128 = vcmask 64512
    %v130 = vsel %vm128, %v93, 0
    %132 = vmatprep.subr.mxu0 %v95
    %133 = vmatpush1.msra.mxu0 %v94
    %134 = vmatprep.subr.mxu0 %v97
    %135 = vmatpush1.msra.mxu0 %v96
    %136 = vmatprep.subr.mxu0 %v99
    %137 = vmatpush1.msra.mxu0 %v98
    %138 = vmatprep.subr.mxu0 %v101
    %139 = vmatpush1.msra.mxu0 %v100
    %140 = vmatprep.subr.mxu0 %v103
    %141 = vmatpush1.msra.mxu0 %v102
    %142 = vmatprep.subr.mxu0 %v105
    %143 = vmatpush1.msra.mxu0 %v104
    %144 = vmatprep.subr.mxu0 %v107
    %145 = vmatpush1.msra.mxu0 %v106
    %146 = vmatprep.subr.mxu0 %v109
    %147 = vmatpush1.msra.mxu0 %v108
    %148 = vmatprep.subr.mxu0 %v111
    %149 = vmatpush1.msra.mxu0 %v110
    %150 = vmatprep.subr.mxu0 %v113
    %151 = vmatpush1.msra.mxu0 %v112
    %152 = vmatprep.subr.mxu0 %v115
    %153 = vmatpush1.msra.mxu0 %v114
    %154 = vmatprep.subr.mxu0 %v117
    %155 = vmatpush1.msra.mxu0 %v116
    %156 = vmatprep.subr.mxu0 %v119
    %157 = vmatpush1.msra.mxu0 %v118
    %158 = vmatprep.subr.mxu0 %v121
    %159 = vmatpush1.msra.mxu0 %v120
    %160 = vmatprep.subr.mxu0 %v123
    %161 = vmatpush1.msra.mxu0 %v122
    %162 = vmatprep.subr.mxu0 %v125
    %163 = vmatpush1.msra.mxu0 %v124
    %164 = vmatprep.subr.mxu0 %v127
    %165 = vmatpush1.msra.mxu0 %v126
    %166 = vmatprep.subr.mxu0 0.0
    %167 = vmatpush1.msra.mxu0 0.0
    %168 = vmatprep.subr.mxu0 0.0
    %169 = vmatpush1.msra.mxu0 0.0
    %170 = vmatprep.subr.mxu0 0.0
    %171 = vmatpush1.msra.mxu0 0.0
    %172 = vmatprep.subr.mxu0 0.0
    %173 = vmatpush1.msra.mxu0 0.0
    %174 = vmatprep.subr.mxu0 0.0
    %175 = vmatpush1.msra.mxu0 0.0
    %176 = vmatprep.subr.mxu0 0.0
    %177 = vmatpush1.msra.mxu0 0.0
    %178 = vmatprep.subr.mxu0 0.0
    %179 = vmatpush1.msra.mxu0 0.0
    %180 = vmatprep.subr.mxu0 0.0
    %181 = vmatpush1.msra.mxu0 0.0
    %182 = vmatprep.subr.mxu0 0.0
    %183 = vmatpush1.msra.mxu0 0.0
    %184 = vmatprep.subr.mxu0 0.0
    %185 = vmatpush1.msra.mxu0 0.0
    %186 = vmatprep.subr.mxu0 0.0
    %187 = vmatpush1.msra.mxu0 0.0
    %188 = vmatprep.subr.mxu0 0.0
    %189 = vmatpush1.msra.mxu0 0.0
    %190 = vmatprep.subr.mxu0 0.0
    %191 = vmatpush1.msra.mxu0 0.0
    %192 = vmatprep.subr.mxu0 0.0
    %193 = vmatpush1.msra.mxu0 0.0
    %194 = vmatprep.subr.mxu0 0.0
    %195 = vmatpush1.msra.mxu0 0.0
    %196 = vmatprep.mubr.f32.mxu0 %v130
    %197 = vmatmul.mubr.f32.gmra.mrb[0].mxu0 %v92
    %v198 = vpop.f32.mrb[0].mxu0
    %v199 = vadd.f32 0.0, %v198
    %v200 = vpop.f32.mrb[0].mxu0
    %v201 = vadd.f32 0.0, %v200
    %202 = vdwg.mxu0
    %203 = vst [vmem:[%s3] sm:$0xff] %v199
    %204 = vst [vmem:[%s3 + $0x8] sm:$0xff] %v201
    // Predicated region
    $region18: #{_lambda_.1} parent=1 // pred_check
      _
    $region19: #{_lambda_.1} parent=1 // pred_check_branch
      %206 = sbr.rel (0) target = $region21
    $region20: #{_lambda_.1} parent=1 // pred_region
      _
    $region21: #{_lambda_.1} parent=1 // pred_fallthru
      _
    // Predicated region
    $region22: #{_lambda_.1} parent=1 // pred_check
      _
    $region23: #{_lambda_.1} parent=1 // pred_check_branch
      %208 = sbr.rel (0) target = $region25
    $region24: #{_lambda_.1} parent=1 // pred_region
      _
    $region25: #{_lambda_.1} parent=1 // pred_fallthru
      _
    %209 = vsyncpa [#allocation3], 1

</llo_original>
